<compile_context>
chip_gen: v7x
topology: tpu7x:2x2x1
jax: 0.10.0
libtpu: 0.0.40
codegen_flags: <defaults>
</compile_context>

<pallas_src>
import jax
import jax.numpy as jnp
from jax.experimental import pallas as pl
from jax.experimental.pallas import tpu as pltpu

IN_DIM = 100
OUT_DIM = 100
HID = OUT_DIM * 3            # 300
IN_PAD, HID_PAD, OUT_PAD = 128, 384, 128
LN_EPS = 1e-5


def multilayer_kernel(x_ref, w1_ref, w2_ref, w3_ref, p_ref, o_ref):
    x = x_ref[...]                     # (bm, IN_PAD)  bf16
    p = p_ref[...]                     # (8, HID_PAD)  f32, packed vectors (single read)

    b1 = p[0:1, :]                     # (1, 384)
    b2 = p[1:2, :]
    g_mid = p[2:3, :]
    bt_mid = p[3:4, :]
    b3 = p[4:5, :OUT_PAD]              # (1, 128)
    g_out = p[5:6, :OUT_PAD]
    bt_out = p[6:7, :OUT_PAD]

    # Lane masks so LayerNorm stats only see the real (unpadded) columns.
    mask_mid = (jax.lax.broadcasted_iota(jnp.int32, (1, HID_PAD), 1) < HID
                ).astype(jnp.float32)
    mask_out = (jax.lax.broadcasted_iota(jnp.int32, (1, OUT_PAD), 1) < OUT_DIM
                ).astype(jnp.float32)

    def layernorm(y, mask, inv_d, gamma, beta):
        # Padded columns of y are exactly zero, so the plain sum already equals
        # the sum over real columns; variance is masked explicitly because
        # (y - mean) is nonzero in the padded lanes.
        mean = jnp.sum(y, axis=-1, keepdims=True) * inv_d
        diff = (y - mean) * mask
        var = jnp.sum(diff * diff, axis=-1, keepdims=True) * inv_d
        return diff * jax.lax.rsqrt(var + LN_EPS) * gamma + beta

    inv_hid = jnp.float32(1.0 / HID)
    inv_out = jnp.float32(1.0 / OUT_DIM)

    # fc1 -> ReLU -> LayerNorm(300)          (bf16 MXU inputs, f32 accumulation)
    h = jnp.dot(x, w1_ref[...], preferred_element_type=jnp.float32) + b1
    h = layernorm(jnp.maximum(h, 0.0), mask_mid, inv_hid, g_mid, bt_mid)

    # fc2 -> ReLU -> LayerNorm(300)  (same shared gamma/beta as above)
    h = jnp.dot(h.astype(jnp.bfloat16), w2_ref[...],
                preferred_element_type=jnp.float32) + b2
    h = layernorm(jnp.maximum(h, 0.0), mask_mid, inv_hid, g_mid, bt_mid)

    # fc3 -> LayerNorm(100)
    y = jnp.dot(h.astype(jnp.bfloat16), w3_ref[...],
                preferred_element_type=jnp.float32) + b3
    o_ref[...] = layernorm(y, mask_out, inv_out, g_out, bt_out)


def _pad2(a, rows, cols):
    return jnp.pad(a, ((0, rows - a.shape[0]), (0, cols - a.shape[1])))


def _row(v, n=HID_PAD):
    return jnp.pad(v.astype(jnp.float32), (0, n - v.shape[0]))


def multilayer_forward(x, w1, b1, w2, b2, w3, b3, g_mid, bt_mid, g_out, bt_out):
    B = x.shape[0]

    # --- Wrapper-side padding / packing (kernel only sees lane-aligned tiles) ---
    # x goes to the MXU as bf16 anyway -> ship it as bf16 (half the input DMA bytes).
    xp = _pad2(x, B, IN_PAD).astype(jnp.bfloat16)
    w1p = _pad2(w1, IN_PAD, HID_PAD).astype(jnp.bfloat16)
    w2p = _pad2(w2, HID_PAD, HID_PAD).astype(jnp.bfloat16)
    w3p = _pad2(w3, HID_PAD, OUT_PAD).astype(jnp.bfloat16)
    params = jnp.stack([_row(b1), _row(b2), _row(g_mid), _row(bt_mid),
                        _row(b3), _row(g_out), _row(bt_out),
                        jnp.zeros((HID_PAD,), jnp.float32)], axis=0)   # (8, 384)

    # Batch tiling: one 8-aligned block for small batches; 256-row "parallel" blocks
    # for large batches so the batch axis shards across v7x's two TensorCores.
    if B > 256:
        bm = 256
    else:
        bm = max(8, pl.cdiv(B, 8) * 8)
    Bp = pl.cdiv(B, bm) * bm
    if Bp != B:
        xp = jnp.pad(xp, ((0, Bp - B), (0, 0)))
    grid = (Bp // bm,)

    out = pl.pallas_call(
        multilayer_kernel,
        out_shape=jax.ShapeDtypeStruct((Bp, OUT_PAD), jnp.float32),
        grid=grid,
        in_specs=[
            pl.BlockSpec((bm, IN_PAD), lambda i: (i, 0)),
            pl.BlockSpec((IN_PAD, HID_PAD), lambda i: (0, 0)),
            pl.BlockSpec((HID_PAD, HID_PAD), lambda i: (0, 0)),
            pl.BlockSpec((HID_PAD, OUT_PAD), lambda i: (0, 0)),
            pl.BlockSpec((8, HID_PAD), lambda i: (0, 0)),
        ],
        out_specs=pl.BlockSpec((bm, OUT_PAD), lambda i: (i, 0)),
        compiler_params=pltpu.CompilerParams(dimension_semantics=("parallel",)),
    )(xp, w1p, w2p, w3p, params)

    return out[:B, :OUT_DIM]


def init_params(key, in_dim=IN_DIM, out_dim=OUT_DIM):
    hid = out_dim * 3
    ks = jax.random.split(key, 10)
    # PyTorch nn.Linear default init: U(-1/sqrt(fan_in), 1/sqrt(fan_in))
    l1 = 1.0 / jnp.sqrt(jnp.float32(in_dim))
    l2 = 1.0 / jnp.sqrt(jnp.float32(hid))
    w1 = jax.random.uniform(ks[0], (in_dim, hid), jnp.float32, -l1, l1)
    b1 = jax.random.uniform(ks[1], (hid,), jnp.float32, -l1, l1)
    w2 = jax.random.uniform(ks[2], (hid, hid), jnp.float32, -l2, l2)
    b2 = jax.random.uniform(ks[3], (hid,), jnp.float32, -l2, l2)
    w3 = jax.random.uniform(ks[4], (hid, out_dim), jnp.float32, -l2, l2)
    b3 = jax.random.uniform(ks[5], (out_dim,), jnp.float32, -l2, l2)
    # LayerNorm affine (PyTorch default is ones/zeros; perturbed here so the
    # affine + padding paths are actually exercised by the check).
    g_mid = 1.0 + 0.1 * jax.random.uniform(ks[6], (hid,), jnp.float32, -1.0, 1.0)
    bt_mid = 0.1 * jax.random.uniform(ks[7], (hid,), jnp.float32, -1.0, 1.0)
    g_out = 1.0 + 0.1 * jax.random.uniform(ks[8], (out_dim,), jnp.float32, -1.0, 1.0)
    bt_out = 0.1 * jax.random.uniform(ks[9], (out_dim,), jnp.float32, -1.0, 1.0)
    return w1, b1, w2, b2, w3, b3, g_mid, bt_mid, g_out, bt_out


def _ln_ref(y, g, b):
    m = jnp.mean(y, axis=-1, keepdims=True)
    v = jnp.mean((y - m) ** 2, axis=-1, keepdims=True)
    return (y - m) * jax.lax.rsqrt(v + LN_EPS) * g + b


def ref_forward(x, w1, b1, w2, b2, w3, b3, g_mid, bt_mid, g_out, bt_out,
                matmul_dtype=jnp.bfloat16):
    def mm(a, w):
        return jnp.dot(a.astype(matmul_dtype), w.astype(matmul_dtype),
                       preferred_element_type=jnp.float32)
    h = _ln_ref(jnp.maximum(mm(x, w1) + b1, 0.0), g_mid, bt_mid)
    h = _ln_ref(jnp.maximum(mm(h, w2) + b2, 0.0), g_mid, bt_mid)
    return _ln_ref(mm(h, w3) + b3, g_out, bt_out)


if __name__ == "__main__":
    batch = 8
    key = jax.random.PRNGKey(0)
    kx, kp = jax.random.split(key)
    x = jax.random.normal(kx, (batch, IN_DIM), jnp.float32)
    params = init_params(kp)

    fwd = jax.jit(multilayer_forward)
    out = fwd(x, *params)
    jax.block_until_ready(out)

    # Precision-matched pure-JAX reference (bf16 matmul inputs, f32 accumulation + epilogue).
    ref_bf16 = ref_forward(x, *params, matmul_dtype=jnp.bfloat16)
    assert jnp.allclose(out, ref_bf16, atol=2e-3, rtol=2e-3), \
        f"mismatch vs bf16-matched ref: {jnp.max(jnp.abs(out - ref_bf16))}"

    # Looser sanity check against the full-f32 reference (PyTorch-equivalent math).
    ref_f32 = ref_forward(x, *params, matmul_dtype=jnp.float32)
    assert jnp.allclose(out, ref_f32, atol=5e-2, rtol=5e-2), \
        f"mismatch vs f32 ref: {jnp.max(jnp.abs(out - ref_f32))}"

    print("KERNEL_OK")
</pallas_src>

<mosaic_0001>
module attributes {stable_mosaic.version = 11 : i64} {
  func.func @multilayer_kernel(%arg0: i32, %arg1: memref<8x128xbf16, #tpu.memory_space<vmem>>, %arg2: memref<128x384xbf16, #tpu.memory_space<vmem>>, %arg3: memref<384x384xbf16, #tpu.memory_space<vmem>>, %arg4: memref<384x128xbf16, #tpu.memory_space<vmem>>, %arg5: memref<8x384xf32, #tpu.memory_space<vmem>>, %arg6: memref<8x128xf32, #tpu.memory_space<vmem>>) attributes {dimension_semantics = [#tpu.dimension_semantics<parallel>], iteration_bounds = array<i64: 1>, scalar_prefetch = 0 : i64, scratch_operands = 0 : i64, tpu.core_type = #tpu.core_type<tc>, window_params = [{transform_indices = @transform_0, window_bounds = array<i64: 8, 128>}, {pipeline_mode = #tpu.pipeline_mode<synchronous>, transform_indices = @transform_1, window_bounds = array<i64: 128, 384>}, {pipeline_mode = #tpu.pipeline_mode<synchronous>, transform_indices = @transform_2, window_bounds = array<i64: 384, 384>}, {pipeline_mode = #tpu.pipeline_mode<synchronous>, transform_indices = @transform_3, window_bounds = array<i64: 384, 128>}, {pipeline_mode = #tpu.pipeline_mode<synchronous>, transform_indices = @transform_4, window_bounds = array<i64: 8, 384>}, {transform_indices = @transform_5, window_bounds = array<i64: 8, 128>}]} {
    %c0 = arith.constant 0 : index
    %c0_0 = arith.constant 0 : index
    %0 = vector.load %arg1[%c0, %c0_0] : memref<8x128xbf16, #tpu.memory_space<vmem>>, vector<8x128xbf16>
    %c0_1 = arith.constant 0 : index
    %c0_2 = arith.constant 0 : index
    %1 = vector.load %arg5[%c0_1, %c0_2] : memref<8x384xf32, #tpu.memory_space<vmem>>, vector<8x384xf32>
    %2 = vector.extract_strided_slice %1 {offsets = [0, 0], sizes = [1, 384], strides = [1, 1]} : vector<8x384xf32> to vector<1x384xf32>
    %3 = vector.extract_strided_slice %1 {offsets = [1, 0], sizes = [1, 384], strides = [1, 1]} : vector<8x384xf32> to vector<1x384xf32>
    %4 = vector.extract_strided_slice %1 {offsets = [2, 0], sizes = [1, 384], strides = [1, 1]} : vector<8x384xf32> to vector<1x384xf32>
    %5 = vector.extract_strided_slice %1 {offsets = [3, 0], sizes = [1, 384], strides = [1, 1]} : vector<8x384xf32> to vector<1x384xf32>
    %6 = vector.extract_strided_slice %1 {offsets = [4, 0], sizes = [1, 128], strides = [1, 1]} : vector<8x384xf32> to vector<1x128xf32>
    %7 = vector.extract_strided_slice %1 {offsets = [5, 0], sizes = [1, 128], strides = [1, 1]} : vector<8x384xf32> to vector<1x128xf32>
    %8 = vector.extract_strided_slice %1 {offsets = [6, 0], sizes = [1, 128], strides = [1, 1]} : vector<8x384xf32> to vector<1x128xf32>
    %9 = tpu.iota {dimensions = array<i32: 1>} : vector<1x384xi32>
    %c300_i32 = arith.constant 300 : i32
    %10 = vector.broadcast %c300_i32 : i32 to vector<1x384xi32>
    %11 = arith.cmpi slt, %9, %10 : vector<1x384xi32>
    %12 = arith.extui %11 : vector<1x384xi1> to vector<1x384xi32>
    %13 = arith.sitofp %12 : vector<1x384xi32> to vector<1x384xf32>
    %14 = tpu.iota {dimensions = array<i32: 1>} : vector<1x128xi32>
    %c100_i32 = arith.constant 100 : i32
    %15 = vector.broadcast %c100_i32 : i32 to vector<1x128xi32>
    %16 = arith.cmpi slt, %14, %15 : vector<1x128xi32>
    %17 = arith.extui %16 : vector<1x128xi1> to vector<1x128xi32>
    %18 = arith.sitofp %17 : vector<1x128xi32> to vector<1x128xf32>
    %c0_3 = arith.constant 0 : index
    %c0_4 = arith.constant 0 : index
    %19 = vector.load %arg2[%c0_3, %c0_4] : memref<128x384xbf16, #tpu.memory_space<vmem>>, vector<128x384xbf16>
    %cst = arith.constant dense<0.000000e+00> : vector<8x384xf32>
    %20 = tpu.matmul %0, %19, %cst {dimension_numbers = #tpu.dot_dimension_numbers<[1], [0], [0], [1], [0, 0, 1, 1], [], []>} : vector<8x128xbf16>, vector<128x384xbf16>, vector<8x384xf32> -> vector<8x384xf32>
    %21 = vector.broadcast %2 : vector<1x384xf32> to vector<8x384xf32>
    %22 = arith.addf %20, %21 : vector<8x384xf32>
    %cst_5 = arith.constant 0.000000e+00 : f32
    %23 = vector.broadcast %cst_5 : f32 to vector<8x384xf32>
    %24 = arith.maximumf %22, %23 : vector<8x384xf32>
    %cst_6 = arith.constant dense<0.000000e+00> : vector<8xf32>
    %25 = vector.multi_reduction <add>, %24, %cst_6 [1] : vector<8x384xf32> to vector<8xf32>
    %26 = vector.shape_cast %25 : vector<8xf32> to vector<8x1xf32>
    %cst_7 = arith.constant 0.00333333341 : f32
    %27 = vector.broadcast %cst_7 : f32 to vector<8x1xf32>
    %28 = arith.mulf %26, %27 : vector<8x1xf32>
    %29 = vector.broadcast %28 : vector<8x1xf32> to vector<8x384xf32>
    %30 = arith.subf %24, %29 : vector<8x384xf32>
    %31 = vector.broadcast %13 : vector<1x384xf32> to vector<8x384xf32>
    %32 = arith.mulf %30, %31 : vector<8x384xf32>
    %33 = arith.mulf %32, %32 : vector<8x384xf32>
    %cst_8 = arith.constant dense<0.000000e+00> : vector<8xf32>
    %34 = vector.multi_reduction <add>, %33, %cst_8 [1] : vector<8x384xf32> to vector<8xf32>
    %35 = vector.shape_cast %34 : vector<8xf32> to vector<8x1xf32>
    %cst_9 = arith.constant 0.00333333341 : f32
    %36 = vector.broadcast %cst_9 : f32 to vector<8x1xf32>
    %37 = arith.mulf %35, %36 : vector<8x1xf32>
    %cst_10 = arith.constant 9.99999974E-6 : f32
    %38 = vector.broadcast %cst_10 : f32 to vector<8x1xf32>
    %39 = arith.addf %37, %38 : vector<8x1xf32>
    %40 = math.rsqrt %39 : vector<8x1xf32>
    %41 = vector.broadcast %40 : vector<8x1xf32> to vector<8x384xf32>
    %42 = arith.mulf %32, %41 : vector<8x384xf32>
    %43 = vector.broadcast %4 : vector<1x384xf32> to vector<8x384xf32>
    %44 = arith.mulf %42, %43 : vector<8x384xf32>
    %45 = vector.broadcast %5 : vector<1x384xf32> to vector<8x384xf32>
    %46 = arith.addf %44, %45 : vector<8x384xf32>
    %47 = arith.truncf %46 : vector<8x384xf32> to vector<8x384xbf16>
    %c0_11 = arith.constant 0 : index
    %c0_12 = arith.constant 0 : index
    %48 = vector.load %arg3[%c0_11, %c0_12] : memref<384x384xbf16, #tpu.memory_space<vmem>>, vector<384x384xbf16>
    %cst_13 = arith.constant dense<0.000000e+00> : vector<8x384xf32>
    %49 = tpu.matmul %47, %48, %cst_13 {dimension_numbers = #tpu.dot_dimension_numbers<[1], [0], [0], [1], [0, 0, 1, 1], [], []>} : vector<8x384xbf16>, vector<384x384xbf16>, vector<8x384xf32> -> vector<8x384xf32>
    %50 = vector.broadcast %3 : vector<1x384xf32> to vector<8x384xf32>
    %51 = arith.addf %49, %50 : vector<8x384xf32>
    %cst_14 = arith.constant 0.000000e+00 : f32
    %52 = vector.broadcast %cst_14 : f32 to vector<8x384xf32>
    %53 = arith.maximumf %51, %52 : vector<8x384xf32>
    %cst_15 = arith.constant dense<0.000000e+00> : vector<8xf32>
    %54 = vector.multi_reduction <add>, %53, %cst_15 [1] : vector<8x384xf32> to vector<8xf32>
    %55 = vector.shape_cast %54 : vector<8xf32> to vector<8x1xf32>
    %cst_16 = arith.constant 0.00333333341 : f32
    %56 = vector.broadcast %cst_16 : f32 to vector<8x1xf32>
    %57 = arith.mulf %55, %56 : vector<8x1xf32>
    %58 = vector.broadcast %57 : vector<8x1xf32> to vector<8x384xf32>
    %59 = arith.subf %53, %58 : vector<8x384xf32>
    %60 = vector.broadcast %13 : vector<1x384xf32> to vector<8x384xf32>
    %61 = arith.mulf %59, %60 : vector<8x384xf32>
    %62 = arith.mulf %61, %61 : vector<8x384xf32>
    %cst_17 = arith.constant dense<0.000000e+00> : vector<8xf32>
    %63 = vector.multi_reduction <add>, %62, %cst_17 [1] : vector<8x384xf32> to vector<8xf32>
    %64 = vector.shape_cast %63 : vector<8xf32> to vector<8x1xf32>
    %cst_18 = arith.constant 0.00333333341 : f32
    %65 = vector.broadcast %cst_18 : f32 to vector<8x1xf32>
    %66 = arith.mulf %64, %65 : vector<8x1xf32>
    %cst_19 = arith.constant 9.99999974E-6 : f32
    %67 = vector.broadcast %cst_19 : f32 to vector<8x1xf32>
    %68 = arith.addf %66, %67 : vector<8x1xf32>
    %69 = math.rsqrt %68 : vector<8x1xf32>
    %70 = vector.broadcast %69 : vector<8x1xf32> to vector<8x384xf32>
    %71 = arith.mulf %61, %70 : vector<8x384xf32>
    %72 = vector.broadcast %4 : vector<1x384xf32> to vector<8x384xf32>
    %73 = arith.mulf %71, %72 : vector<8x384xf32>
    %74 = vector.broadcast %5 : vector<1x384xf32> to vector<8x384xf32>
    %75 = arith.addf %73, %74 : vector<8x384xf32>
    %76 = arith.truncf %75 : vector<8x384xf32> to vector<8x384xbf16>
    %c0_20 = arith.constant 0 : index
    %c0_21 = arith.constant 0 : index
    %77 = vector.load %arg4[%c0_20, %c0_21] : memref<384x128xbf16, #tpu.memory_space<vmem>>, vector<384x128xbf16>
    %cst_22 = arith.constant dense<0.000000e+00> : vector<8x128xf32>
    %78 = tpu.matmul %76, %77, %cst_22 {dimension_numbers = #tpu.dot_dimension_numbers<[1], [0], [0], [1], [0, 0, 1, 1], [], []>} : vector<8x384xbf16>, vector<384x128xbf16>, vector<8x128xf32> -> vector<8x128xf32>
    %79 = vector.broadcast %6 : vector<1x128xf32> to vector<8x128xf32>
    %80 = arith.addf %78, %79 : vector<8x128xf32>
    %cst_23 = arith.constant dense<0.000000e+00> : vector<8xf32>
    %81 = vector.multi_reduction <add>, %80, %cst_23 [1] : vector<8x128xf32> to vector<8xf32>
    %82 = vector.shape_cast %81 : vector<8xf32> to vector<8x1xf32>
    %cst_24 = arith.constant 0.00999999977 : f32
    %83 = vector.broadcast %cst_24 : f32 to vector<8x1xf32>
    %84 = arith.mulf %82, %83 : vector<8x1xf32>
    %85 = vector.broadcast %84 : vector<8x1xf32> to vector<8x128xf32>
    %86 = arith.subf %80, %85 : vector<8x128xf32>
    %87 = vector.broadcast %18 : vector<1x128xf32> to vector<8x128xf32>
    %88 = arith.mulf %86, %87 : vector<8x128xf32>
    %89 = arith.mulf %88, %88 : vector<8x128xf32>
    %cst_25 = arith.constant dense<0.000000e+00> : vector<8xf32>
    %90 = vector.multi_reduction <add>, %89, %cst_25 [1] : vector<8x128xf32> to vector<8xf32>
    %91 = vector.shape_cast %90 : vector<8xf32> to vector<8x1xf32>
    %cst_26 = arith.constant 0.00999999977 : f32
    %92 = vector.broadcast %cst_26 : f32 to vector<8x1xf32>
    %93 = arith.mulf %91, %92 : vector<8x1xf32>
    %cst_27 = arith.constant 9.99999974E-6 : f32
    %94 = vector.broadcast %cst_27 : f32 to vector<8x1xf32>
    %95 = arith.addf %93, %94 : vector<8x1xf32>
    %96 = math.rsqrt %95 : vector<8x1xf32>
    %97 = vector.broadcast %96 : vector<8x1xf32> to vector<8x128xf32>
    %98 = arith.mulf %88, %97 : vector<8x128xf32>
    %99 = vector.broadcast %7 : vector<1x128xf32> to vector<8x128xf32>
    %100 = arith.mulf %98, %99 : vector<8x128xf32>
    %101 = vector.broadcast %8 : vector<1x128xf32> to vector<8x128xf32>
    %102 = arith.addf %100, %101 : vector<8x128xf32>
    %c0_28 = arith.constant 0 : index
    %c0_29 = arith.constant 0 : index
    %103 = vector.load %arg6[%c0_28, %c0_29] : memref<8x128xf32, #tpu.memory_space<vmem>>, vector<8x128xf32>
    tpu.vector_store %arg6[%c0_28, %c0_29], %102 {strides = array<i32>} : memref<8x128xf32, #tpu.memory_space<vmem>>, vector<8x128xf32>,
    return
  }
  func.func @transform_0(%arg0: i32) -> (i32, i32) {
    %c0_i32 = arith.constant 0 : i32
    %c0_i32_0 = arith.constant 0 : i32
    return %arg0, %c0_i32 : i32, i32
  }
  func.func @transform_1(%arg0: i32) -> (i32, i32) {
    %c0_i32 = arith.constant 0 : i32
    %c0_i32_0 = arith.constant 0 : i32
    %c0_i32_1 = arith.constant 0 : i32
    return %c0_i32, %c0_i32_0 : i32, i32
  }
  func.func @transform_2(%arg0: i32) -> (i32, i32) {
    %c0_i32 = arith.constant 0 : i32
    %c0_i32_0 = arith.constant 0 : i32
    %c0_i32_1 = arith.constant 0 : i32
    return %c0_i32, %c0_i32_0 : i32, i32
  }
  func.func @transform_3(%arg0: i32) -> (i32, i32) {
    %c0_i32 = arith.constant 0 : i32
    %c0_i32_0 = arith.constant 0 : i32
    %c0_i32_1 = arith.constant 0 : i32
    return %c0_i32, %c0_i32_0 : i32, i32
  }
  func.func @transform_4(%arg0: i32) -> (i32, i32) {
    %c0_i32 = arith.constant 0 : i32
    %c0_i32_0 = arith.constant 0 : i32
    %c0_i32_1 = arith.constant 0 : i32
    return %c0_i32, %c0_i32_0 : i32, i32
  }
  func.func @transform_5(%arg0: i32) -> (i32, i32) {
    %c0_i32 = arith.constant 0 : i32
    %c0_i32_0 = arith.constant 0 : i32
    return %arg0, %c0_i32 : i32, i32
  }
}

</mosaic_0001>

<llo_original>
// kernel: multilayer_forward.1
$region0: #{multilayer_forward.1}
  #allocation0 [shape = 'u32[]', space=smem, size = 0x4, offset = 0x4, fixed_abs, tag = 'smem constant byte address 0x4 - core index']
  #allocation1 [shape = 'u32[144,128]{1,0:T(1,128)}', space=vmem, size = 0x12000, scoped, tag = 'internal scratch']
  %s0 = inlined_call_operand.vmem [shape: bf16[8,128], index: 0, kind: input, shape index: {}]
  %s1 = inlined_call_operand.vmem [shape: bf16[128,384], index: 1, kind: input, shape index: {}]
  %s2 = inlined_call_operand.vmem [shape: bf16[384,384], index: 2, kind: input, shape index: {}]
  %s3 = inlined_call_operand.vmem [shape: bf16[384,128], index: 3, kind: input, shape index: {}]
  %s4 = inlined_call_operand.vmem [shape: f32[8,384], index: 4, kind: input, shape index: {}]
  %s5 = inlined_call_operand.hbm [shape: f32[8,128], index: 5, kind: output, shape index: {}]
  %s6 = sld [smem:[#allocation0]]
  $region30: #{multilayer_forward.1} parent=0
    _
  %s8 = ssub.s32 1, %s6
  %s9 = scalar_select 0, %s8, %s6
  $region1: #{multilayer_forward.1} parent=0
    #allocation2 [shape = 'u8[4096]{0}', space=vmem, size = 0x1000, scoped, tag = 'output window, operand 0, single buffered']
    #allocation3 [shape = 's32[1]{0}', space=sflag, size = 0x4, scoped, tag = 'scoped memory for multilayer_forward.1']
    %10 = vsyncpa [#allocation3], 0
    // Predicated region
    $region2: #{multilayer_forward.1} parent=1 // pred_check
      _
    $region3: #{multilayer_forward.1} parent=1 // pred_check_branch
      %12 = sbr.rel (0) target = $region5
    $region4: #{multilayer_forward.1} parent=1 // pred_region
      _
    $region5: #{multilayer_forward.1} parent=1 // pred_fallthru
      _
    // Predicated region
    $region6: #{multilayer_forward.1} parent=1 // pred_check
      _
    $region7: #{multilayer_forward.1} parent=1 // pred_check_branch
      %14 = sbr.rel (0) target = $region9
    $region8: #{multilayer_forward.1} parent=1 // pred_region
      _
    $region9: #{multilayer_forward.1} parent=1 // pred_fallthru
      _
    // Predicated region
    $region10: #{multilayer_forward.1} parent=1 // pred_check
      _
    $region11: #{multilayer_forward.1} parent=1 // pred_check_branch
      %16 = sbr.rel (0) target = $region13
    $region12: #{multilayer_forward.1} parent=1 // pred_region
      _
    $region13: #{multilayer_forward.1} parent=1 // pred_fallthru
      _
    // Predicated region
    $region14: #{multilayer_forward.1} parent=1 // pred_check
      _
    $region15: #{multilayer_forward.1} parent=1 // pred_check_branch
      %18 = sbr.rel (0) target = $region17
    $region16: #{multilayer_forward.1} parent=1 // pred_region
      _
    $region17: #{multilayer_forward.1} parent=1 // pred_fallthru
      _
    // Predicated region
    $region18: #{multilayer_forward.1} parent=1 // pred_check
      _
    $region19: #{multilayer_forward.1} parent=1 // pred_check_branch
      %20 = sbr.rel (0) target = $region21
    $region20: #{multilayer_forward.1} parent=1 // pred_region
      _
    $region21: #{multilayer_forward.1} parent=1 // pred_fallthru
      _
    %v22 = vld [vmem:[%s0] sm:$0xf]
    %v23 = vld [vmem:[%s4] sm:$0xff]
    %v24 = vld [vmem:[%s4 + $0x8] sm:$0xff]
    %v25 = vld [vmem:[%s4 + $0x10] sm:$0xff]
    %v26 = vlaneseq
    %v27 = vand.u32 %v26, 127
    %v28 = vadd.s32 %v27, 128
    %v29 = vadd.s32 %v27, 256
    %vm30 = vcmp.lt.s32.totalorder %v27, 300
    %vm31 = vcmp.lt.s32.totalorder %v28, 300
    %vm32 = vcmp.lt.s32.totalorder %v29, 300
    %v33 = vsel %vm30, 1, 0
    %v34 = vsel %vm31, 1, 0
    %v35 = vsel %vm32, 1, 0
    %v36 = vcvt.s32.f32 %v33
    %v37 = vcvt.s32.f32 %v34
    %v38 = vcvt.s32.f32 %v35
    %vm39 = vcmp.lt.s32.totalorder %v27, 100
    %v40 = vsel %vm39, 1, 0
    %v41 = vcvt.s32.f32 %v40
    %v42 = vld [vmem:[%s1] sm:$0xff]
    %v43 = vld [vmem:[%s1 + $0x8] sm:$0xf]
    %v44 = vld [vmem:[%s1 + $0xc] sm:$0xff]
    %v45 = vld [vmem:[%s1 + $0x14] sm:$0xf]
    %v46 = vld [vmem:[%s1 + $0x18] sm:$0xff]
    %v47 = vld [vmem:[%s1 + $0x20] sm:$0xf]
    %v48 = vld [vmem:[%s1 + $0x24] sm:$0xff]
    %v49 = vld [vmem:[%s1 + $0x2c] sm:$0xf]
    %v50 = vld [vmem:[%s1 + $0x30] sm:$0xff]
    %v51 = vld [vmem:[%s1 + $0x38] sm:$0xf]
    %v52 = vld [vmem:[%s1 + $0x3c] sm:$0xff]
    %v53 = vld [vmem:[%s1 + $0x44] sm:$0xf]
    %v54 = vld [vmem:[%s1 + $0x48] sm:$0xff]
    %v55 = vld [vmem:[%s1 + $0x50] sm:$0xf]
    %v56 = vld [vmem:[%s1 + $0x54] sm:$0xff]
    %v57 = vld [vmem:[%s1 + $0x5c] sm:$0xf]
    %v58 = vld [vmem:[%s1 + $0x60] sm:$0xff]
    %v59 = vld [vmem:[%s1 + $0x68] sm:$0xf]
    %v60 = vld [vmem:[%s1 + $0x6c] sm:$0xff]
    %v61 = vld [vmem:[%s1 + $0x74] sm:$0xf]
    %v62 = vld [vmem:[%s1 + $0x78] sm:$0xff]
    %v63 = vld [vmem:[%s1 + $0x80] sm:$0xf]
    %v64 = vld [vmem:[%s1 + $0x84] sm:$0xff]
    %v65 = vld [vmem:[%s1 + $0x8c] sm:$0xf]
    %v66 = vld [vmem:[%s1 + $0x90] sm:$0xff]
    %v67 = vld [vmem:[%s1 + $0x98] sm:$0xf]
    %v68 = vld [vmem:[%s1 + $0x9c] sm:$0xff]
    %v69 = vld [vmem:[%s1 + $0xa4] sm:$0xf]
    %v70 = vld [vmem:[%s1 + $0xa8] sm:$0xff]
    %v71 = vld [vmem:[%s1 + $0xb0] sm:$0xf]
    %v72 = vld [vmem:[%s1 + $0xb4] sm:$0xff]
    %v73 = vld [vmem:[%s1 + $0xbc] sm:$0xf]
    %v74 = vlaneseq
    %v75 = vshrl.u32 %v74, 7
    %v76 = vsub.s32 0, %v75
    %v77 = vrot.slane %v23, %v76
    %v78 = vlaneseq
    %v79 = vshrl.u32 %v78, 7
    %v80 = vsub.s32 0, %v79
    %v81 = vrot.slane %v24, %v80
    %v82 = vlaneseq
    %v83 = vshrl.u32 %v82, 7
    %v84 = vsub.s32 0, %v83
    %v85 = vrot.slane %v25, %v84
    %v118 = vunpack.c.l.b16 %v42
    %v119 = vunpack.c.h.b16 %v42
    %v120 = vunpack.c.l.b16 %v43
    %v121 = vunpack.c.l.b16 %v44
    %v122 = vunpack.c.h.b16 %v44
    %v123 = vunpack.c.l.b16 %v45
    %v124 = vunpack.c.l.b16 %v46
    %v125 = vunpack.c.h.b16 %v46
    %v126 = vunpack.c.l.b16 %v47
    %v127 = vunpack.c.l.b16 %v48
    %v128 = vunpack.c.h.b16 %v48
    %v129 = vunpack.c.l.b16 %v49
    %v130 = vunpack.c.l.b16 %v50
    %v131 = vunpack.c.h.b16 %v50
    %v132 = vunpack.c.l.b16 %v51
    %v133 = vunpack.c.l.b16 %v52
    %v134 = vunpack.c.h.b16 %v52
    %v135 = vunpack.c.l.b16 %v53
    %v136 = vunpack.c.l.b16 %v54
    %v137 = vunpack.c.h.b16 %v54
    %v138 = vunpack.c.l.b16 %v55
    %v139 = vunpack.c.l.b16 %v56
    %v140 = vunpack.c.h.b16 %v56
    %v141 = vunpack.c.l.b16 %v57
    %v142 = vunpack.c.l.b16 %v58
    %v143 = vunpack.c.h.b16 %v58
    %v144 = vunpack.c.l.b16 %v59
    %v145 = vunpack.c.l.b16 %v60
    %v146 = vunpack.c.h.b16 %v60
    %v147 = vunpack.c.l.b16 %v61
    %v148 = vunpack.c.l.b16 %v62
    %v149 = vunpack.c.h.b16 %v62
    %v150 = vunpack.c.l.b16 %v63
    %v151 = vunpack.c.l.b16 %v64
    %v152 = vunpack.c.h.b16 %v64
    %v153 = vunpack.c.l.b16 %v65
    %v154 = vunpack.c.l.b16 %v66
    %v155 = vunpack.c.h.b16 %v66
    %v156 = vunpack.c.l.b16 %v67
    %v157 = vunpack.c.l.b16 %v68
    %v158 = vunpack.c.h.b16 %v68
    %v159 = vunpack.c.l.b16 %v69
    %v160 = vunpack.c.l.b16 %v70
    %v161 = vunpack.c.h.b16 %v70
    %v162 = vunpack.c.l.b16 %v71
    %v163 = vunpack.c.l.b16 %v72
    %v164 = vunpack.c.h.b16 %v72
    %v165 = vunpack.c.l.b16 %v73
    %v166 = vpack.c.b16 %v121, %v118
    %v167 = vpack.c.b16 %v122, %v119
    %v168 = vpack.c.b16 %v123, %v120
    %v169 = vpack.c.b16 %v127, %v124
    %v170 = vpack.c.b16 %v128, %v125
    %v171 = vpack.c.b16 %v129, %v126
    %v172 = vpack.c.b16 %v133, %v130
    %v173 = vpack.c.b16 %v134, %v131
    %v174 = vpack.c.b16 %v135, %v132
    %v175 = vpack.c.b16 %v139, %v136
    %v176 = vpack.c.b16 %v140, %v137
    %v177 = vpack.c.b16 %v141, %v138
    %v178 = vpack.c.b16 %v145, %v142
    %v179 = vpack.c.b16 %v146, %v143
    %v180 = vpack.c.b16 %v147, %v144
    %v181 = vpack.c.b16 %v151, %v148
    %v182 = vpack.c.b16 %v152, %v149
    %v183 = vpack.c.b16 %v153, %v150
    %v184 = vpack.c.b16 %v157, %v154
    %v185 = vpack.c.b16 %v158, %v155
    %v186 = vpack.c.b16 %v159, %v156
    %v187 = vpack.c.b16 %v163, %v160
    %v188 = vpack.c.b16 %v164, %v161
    %v189 = vpack.c.b16 %v165, %v162
    %214 = vmatprep.subr.bf16.mxu0 %v167
    %215 = vmatpush1.bf16.msra.mxu0 %v166
    %216 = vmatprep.subr.bf16.mxu0 %v170
    %217 = vmatpush1.bf16.msra.mxu0 %v169
    %218 = vmatprep.subr.bf16.mxu0 %v173
    %219 = vmatpush1.bf16.msra.mxu0 %v172
    %220 = vmatprep.subr.bf16.mxu0 %v176
    %221 = vmatpush1.bf16.msra.mxu0 %v175
    %222 = vmatprep.subr.bf16.mxu0 %v179
    %223 = vmatpush1.bf16.msra.mxu0 %v178
    %224 = vmatprep.subr.bf16.mxu0 %v182
    %225 = vmatpush1.bf16.msra.mxu0 %v181
    %226 = vmatprep.subr.bf16.mxu0 %v185
    %227 = vmatpush1.bf16.msra.mxu0 %v184
    %228 = vmatprep.subr.bf16.mxu0 %v188
    %229 = vmatpush1.bf16.msra.mxu0 %v187
    %230 = vmatprep.subr.bf16.mxu0 0
    %231 = vmatpush1.bf16.msra.mxu0 0
    %232 = vmatprep.subr.bf16.mxu0 0
    %233 = vmatpush1.bf16.msra.mxu0 0
    %234 = vmatprep.subr.bf16.mxu0 0
    %235 = vmatpush1.bf16.msra.mxu0 0
    %236 = vmatprep.subr.bf16.mxu0 0
    %237 = vmatpush1.bf16.msra.mxu0 0
    %238 = vmatprep.subr.bf16.mxu0 0
    %239 = vmatpush1.bf16.msra.mxu0 0
    %240 = vmatprep.subr.bf16.mxu0 0
    %241 = vmatpush1.bf16.msra.mxu0 0
    %242 = vmatprep.subr.bf16.mxu0 0
    %243 = vmatpush1.bf16.msra.mxu0 0
    %244 = vmatprep.subr.bf16.mxu0 0
    %245 = vmatpush1.bf16.msra.mxu0 0
    %246 = vmatprep.mubr.bf16.mxu0 0
    %247 = vmatmul.mubr.bf16.gmra.mrb[0].mxu0 %v22
    %v248 = vpop.f32.mrb[0].mxu0
    %v249 = vadd.f32 %v77, %v248
    %v250 = vpop.f32.mrb[0].mxu0
    %v251 = vadd.f32 %v81, %v250
    %v252 = vpop.f32.mrb[0].mxu0
    %v253 = vpop.f32.mrb[0].mxu0
    %254 = vdwg.mxu0
    %255 = vmatprep.subr.bf16.mxu0 0
    %256 = vmatpush1.bf16.msra.mxu0 %v168
    %257 = vmatprep.subr.bf16.mxu0 0
    %258 = vmatpush1.bf16.msra.mxu0 %v171
    %259 = vmatprep.subr.bf16.mxu0 0
    %260 = vmatpush1.bf16.msra.mxu0 %v174
    %261 = vmatprep.subr.bf16.mxu0 0
    %262 = vmatpush1.bf16.msra.mxu0 %v177
    %263 = vmatprep.subr.bf16.mxu0 0
    %264 = vmatpush1.bf16.msra.mxu0 %v180
    %265 = vmatprep.subr.bf16.mxu0 0
    %266 = vmatpush1.bf16.msra.mxu0 %v183
    %267 = vmatprep.subr.bf16.mxu0 0
    %268 = vmatpush1.bf16.msra.mxu0 %v186
    %269 = vmatprep.subr.bf16.mxu0 0
    %270 = vmatpush1.bf16.msra.mxu0 %v189
    %271 = vmatprep.subr.bf16.mxu0 0
    %272 = vmatpush1.bf16.msra.mxu0 0
    %273 = vmatprep.subr.bf16.mxu0 0
    %274 = vmatpush1.bf16.msra.mxu0 0
    %275 = vmatprep.subr.bf16.mxu0 0
    %276 = vmatpush1.bf16.msra.mxu0 0
    %277 = vmatprep.subr.bf16.mxu0 0
    %278 = vmatpush1.bf16.msra.mxu0 0
    %279 = vmatprep.subr.bf16.mxu0 0
    %280 = vmatpush1.bf16.msra.mxu0 0
    %281 = vmatprep.subr.bf16.mxu0 0
    %282 = vmatpush1.bf16.msra.mxu0 0
    %283 = vmatprep.subr.bf16.mxu0 0
    %284 = vmatpush1.bf16.msra.mxu0 0
    %285 = vmatprep.subr.bf16.mxu0 0
    %286 = vmatpush1.bf16.msra.mxu0 0
    %287 = vmatprep.mubr.bf16.mxu0 0
    %288 = vmatmul.mubr.bf16.gmra.mrb[0].mxu0 %v22
    %v289 = vpop.f32.mrb[0].mxu0
    %v290 = vadd.f32 %v85, %v289
    %v291 = vpop.f32.mrb[0].mxu0
    %v292 = vpop.f32.mrb[0].mxu0
    %v293 = vpop.f32.mrb[0].mxu0
    %294 = vdwg.mxu0
    %v295 = vmax.f32 %v249, 0.0
    %v296 = vmax.f32 %v251, 0.0
    %v297 = vmax.f32 %v290, 0.0
    %v298 = vadd.f32 %v295, %v296
    %v299 = vadd.f32 %v298, %v297
    %300 = vadd.xlane.f32.xlu0 %v299
    %v301 = vpop.xlane.xlu0 %300
    %v302 = vmul.f32 %v301, 0.0033333334
    %v303 = vsub.f32 %v295, %v302
    %v304 = vsub.f32 %v296, %v302
    %v305 = vsub.f32 %v297, %v302
    %v306 = vmul.f32 %v303, %v36
    %v307 = vmul.f32 %v304, %v37
    %v308 = vmul.f32 %v305, %v38
    %v309 = vmul.f32 %v306, %v306
    %v310 = vmul.f32 %v307, %v307
    %v311 = vmul.f32 %v308, %v308
    %v312 = vadd.f32 %v309, %v310
    %v313 = vadd.f32 %v312, %v311
    %314 = vadd.xlane.f32.xlu0 %v313
    %v315 = vpop.xlane.xlu0 %314
    %v316 = vmul.f32 %v315, 0.0033333334
    %v317 = vadd.f32 %v316, 1e-05
    %v318 = vrsqrt.pop %v317
    %v319 = vmul.f32 %v306, %v318
    %v320 = vmul.f32 %v307, %v318
    %v321 = vmul.f32 %v308, %v318
    %v322 = vlaneseq
    %v323 = vshrl.u32 %v322, 7
    %v324 = vsub.s32 2, %v323
    %v325 = vrot.slane %v23, %v324
    %v326 = vlaneseq
    %v327 = vshrl.u32 %v326, 7
    %v328 = vsub.s32 2, %v327
    %v329 = vrot.slane %v24, %v328
    %v330 = vlaneseq
    %v331 = vshrl.u32 %v330, 7
    %v332 = vsub.s32 2, %v331
    %v333 = vrot.slane %v25, %v332
    %v334 = vmul.f32 %v319, %v325
    %v335 = vmul.f32 %v320, %v329
    %v336 = vmul.f32 %v321, %v333
    %v337 = vlaneseq
    %v338 = vshrl.u32 %v337, 7
    %v339 = vsub.s32 3, %v338
    %v340 = vrot.slane %v23, %v339
    %v341 = vlaneseq
    %v342 = vshrl.u32 %v341, 7
    %v343 = vsub.s32 3, %v342
    %v344 = vrot.slane %v24, %v343
    %v345 = vlaneseq
    %v346 = vshrl.u32 %v345, 7
    %v347 = vsub.s32 3, %v346
    %v348 = vrot.slane %v25, %v347
    %v349 = vadd.f32 %v334, %v340
    %v350 = vadd.f32 %v335, %v344
    %v351 = vadd.f32 %v336, %v348
    %v352 = vpack.c.bf16 %v349, %v349
    %v353 = vpack.c.bf16 %v350, %v350
    %v354 = vpack.c.bf16 %v351, %v351
    %v355 = vld [vmem:[%s2] sm:$0xff]
    %v356 = vld [vmem:[%s2 + $0x8] sm:$0xf]
    %v357 = vld [vmem:[%s2 + $0xc] sm:$0xff]
    %v358 = vld [vmem:[%s2 + $0x14] sm:$0xf]
    %v359 = vld [vmem:[%s2 + $0x18] sm:$0xff]
    %v360 = vld [vmem:[%s2 + $0x20] sm:$0xf]
    %v361 = vld [vmem:[%s2 + $0x24] sm:$0xff]
    %v362 = vld [vmem:[%s2 + $0x2c] sm:$0xf]
    %v363 = vld [vmem:[%s2 + $0x30] sm:$0xff]
    %v364 = vld [vmem:[%s2 + $0x38] sm:$0xf]
    %v365 = vld [vmem:[%s2 + $0x3c] sm:$0xff]
    %v366 = vld [vmem:[%s2 + $0x44] sm:$0xf]
    %v367 = vld [vmem:[%s2 + $0x48] sm:$0xff]
    %v368 = vld [vmem:[%s2 + $0x50] sm:$0xf]
    %v369 = vld [vmem:[%s2 + $0x54] sm:$0xff]
    %v370 = vld [vmem:[%s2 + $0x5c] sm:$0xf]
    %v371 = vld [vmem:[%s2 + $0x60] sm:$0xff]
    %v372 = vld [vmem:[%s2 + $0x68] sm:$0xf]
    %v373 = vld [vmem:[%s2 + $0x6c] sm:$0xff]
    %v374 = vld [vmem:[%s2 + $0x74] sm:$0xf]
    %v375 = vld [vmem:[%s2 + $0x78] sm:$0xff]
    %v376 = vld [vmem:[%s2 + $0x80] sm:$0xf]
    %v377 = vld [vmem:[%s2 + $0x84] sm:$0xff]
    %v378 = vld [vmem:[%s2 + $0x8c] sm:$0xf]
    %v379 = vld [vmem:[%s2 + $0x90] sm:$0xff]
    %v380 = vld [vmem:[%s2 + $0x98] sm:$0xf]
    %v381 = vld [vmem:[%s2 + $0x9c] sm:$0xff]
    %v382 = vld [vmem:[%s2 + $0xa4] sm:$0xf]
    %v383 = vld [vmem:[%s2 + $0xa8] sm:$0xff]
    %v384 = vld [vmem:[%s2 + $0xb0] sm:$0xf]
    %v385 = vld [vmem:[%s2 + $0xb4] sm:$0xff]
    %v386 = vld [vmem:[%s2 + $0xbc] sm:$0xf]
    %v387 = vld [vmem:[%s2 + $0xc0] sm:$0xff]
    %v388 = vld [vmem:[%s2 + $0xc8] sm:$0xf]
    %v389 = vld [vmem:[%s2 + $0xcc] sm:$0xff]
    %v390 = vld [vmem:[%s2 + $0xd4] sm:$0xf]
    %v391 = vld [vmem:[%s2 + $0xd8] sm:$0xff]
    %v392 = vld [vmem:[%s2 + $0xe0] sm:$0xf]
    %v393 = vld [vmem:[%s2 + $0xe4] sm:$0xff]
    %v394 = vld [vmem:[%s2 + $0xec] sm:$0xf]
    %v395 = vld [vmem:[%s2 + $0xf0] sm:$0xff]
    %v396 = vld [vmem:[%s2 + $0xf8] sm:$0xf]
    %v397 = vld [vmem:[%s2 + $0xfc] sm:$0xff]
    %v398 = vld [vmem:[%s2 + $0x104] sm:$0xf]
    %v399 = vld [vmem:[%s2 + $0x108] sm:$0xff]
    %v400 = vld [vmem:[%s2 + $0x110] sm:$0xf]
    %v401 = vld [vmem:[%s2 + $0x114] sm:$0xff]
    %v402 = vld [vmem:[%s2 + $0x11c] sm:$0xf]
    %v403 = vld [vmem:[%s2 + $0x120] sm:$0xff]
    %v404 = vld [vmem:[%s2 + $0x128] sm:$0xf]
    %v405 = vld [vmem:[%s2 + $0x12c] sm:$0xff]
    %v406 = vld [vmem:[%s2 + $0x134] sm:$0xf]
    %v407 = vld [vmem:[%s2 + $0x138] sm:$0xff]
    %v408 = vld [vmem:[%s2 + $0x140] sm:$0xf]
    %v409 = vld [vmem:[%s2 + $0x144] sm:$0xff]
    %v410 = vld [vmem:[%s2 + $0x14c] sm:$0xf]
    %v411 = vld [vmem:[%s2 + $0x150] sm:$0xff]
    %v412 = vld [vmem:[%s2 + $0x158] sm:$0xf]
    %v413 = vld [vmem:[%s2 + $0x15c] sm:$0xff]
    %v414 = vld [vmem:[%s2 + $0x164] sm:$0xf]
    %v415 = vld [vmem:[%s2 + $0x168] sm:$0xff]
    %v416 = vld [vmem:[%s2 + $0x170] sm:$0xf]
    %v417 = vld [vmem:[%s2 + $0x174] sm:$0xff]
    %v418 = vld [vmem:[%s2 + $0x17c] sm:$0xf]
    %v419 = vld [vmem:[%s2 + $0x180] sm:$0xff]
    %v420 = vld [vmem:[%s2 + $0x188] sm:$0xf]
    %v421 = vld [vmem:[%s2 + $0x18c] sm:$0xff]
    %v422 = vld [vmem:[%s2 + $0x194] sm:$0xf]
    %v423 = vld [vmem:[%s2 + $0x198] sm:$0xff]
    %v424 = vld [vmem:[%s2 + $0x1a0] sm:$0xf]
    %v425 = vld [vmem:[%s2 + $0x1a4] sm:$0xff]
    %v426 = vld [vmem:[%s2 + $0x1ac] sm:$0xf]
    %v427 = vld [vmem:[%s2 + $0x1b0] sm:$0xff]
    %v428 = vld [vmem:[%s2 + $0x1b8] sm:$0xf]
    %v429 = vld [vmem:[%s2 + $0x1bc] sm:$0xff]
    %v430 = vld [vmem:[%s2 + $0x1c4] sm:$0xf]
    %v431 = vld [vmem:[%s2 + $0x1c8] sm:$0xff]
    %v432 = vld [vmem:[%s2 + $0x1d0] sm:$0xf]
    %v433 = vld [vmem:[%s2 + $0x1d4] sm:$0xff]
    %v434 = vld [vmem:[%s2 + $0x1dc] sm:$0xf]
    %v435 = vld [vmem:[%s2 + $0x1e0] sm:$0xff]
    %v436 = vld [vmem:[%s2 + $0x1e8] sm:$0xf]
    %v437 = vld [vmem:[%s2 + $0x1ec] sm:$0xff]
    %v438 = vld [vmem:[%s2 + $0x1f4] sm:$0xf]
    %v439 = vld [vmem:[%s2 + $0x1f8] sm:$0xff]
    %v440 = vld [vmem:[%s2 + $0x200] sm:$0xf]
    %v441 = vld [vmem:[%s2 + $0x204] sm:$0xff]
    %v442 = vld [vmem:[%s2 + $0x20c] sm:$0xf]
    %v443 = vld [vmem:[%s2 + $0x210] sm:$0xff]
    %v444 = vld [vmem:[%s2 + $0x218] sm:$0xf]
    %v445 = vld [vmem:[%s2 + $0x21c] sm:$0xff]
    %v446 = vld [vmem:[%s2 + $0x224] sm:$0xf]
    %v447 = vld [vmem:[%s2 + $0x228] sm:$0xff]
    %v448 = vld [vmem:[%s2 + $0x230] sm:$0xf]
    %v449 = vld [vmem:[%s2 + $0x234] sm:$0xff]
    %v450 = vld [vmem:[%s2 + $0x23c] sm:$0xf]
    %v451 = vlaneseq
    %v452 = vshrl.u32 %v451, 7
    %v453 = vsub.s32 1, %v452
    %v454 = vrot.slane %v23, %v453
    %v455 = vlaneseq
    %v456 = vshrl.u32 %v455, 7
    %v457 = vsub.s32 1, %v456
    %v458 = vrot.slane %v24, %v457
    %v459 = vlaneseq
    %v460 = vshrl.u32 %v459, 7
    %v461 = vsub.s32 1, %v460
    %v462 = vrot.slane %v25, %v461
    %v559 = vunpack.c.l.b16 %v355
    %v560 = vunpack.c.h.b16 %v355
    %v561 = vunpack.c.l.b16 %v356
    %v562 = vunpack.c.l.b16 %v357
    %v563 = vunpack.c.h.b16 %v357
    %v564 = vunpack.c.l.b16 %v358
    %v565 = vunpack.c.l.b16 %v359
    %v566 = vunpack.c.h.b16 %v359
    %v567 = vunpack.c.l.b16 %v360
    %v568 = vunpack.c.l.b16 %v361
    %v569 = vunpack.c.h.b16 %v361
    %v570 = vunpack.c.l.b16 %v362
    %v571 = vunpack.c.l.b16 %v363
    %v572 = vunpack.c.h.b16 %v363
    %v573 = vunpack.c.l.b16 %v364
    %v574 = vunpack.c.l.b16 %v365
    %v575 = vunpack.c.h.b16 %v365
    %v576 = vunpack.c.l.b16 %v366
    %v577 = vunpack.c.l.b16 %v367
    %v578 = vunpack.c.h.b16 %v367
    %v579 = vunpack.c.l.b16 %v368
    %v580 = vunpack.c.l.b16 %v369
    %v581 = vunpack.c.h.b16 %v369
    %v582 = vunpack.c.l.b16 %v370
    %v583 = vunpack.c.l.b16 %v371
    %v584 = vunpack.c.h.b16 %v371
    %v585 = vunpack.c.l.b16 %v372
    %v586 = vunpack.c.l.b16 %v373
    %v587 = vunpack.c.h.b16 %v373
    %v588 = vunpack.c.l.b16 %v374
    %v589 = vunpack.c.l.b16 %v375
    %v590 = vunpack.c.h.b16 %v375
    %v591 = vunpack.c.l.b16 %v376
    %v592 = vunpack.c.l.b16 %v377
    %v593 = vunpack.c.h.b16 %v377
    %v594 = vunpack.c.l.b16 %v378
    %v595 = vunpack.c.l.b16 %v379
    %v596 = vunpack.c.h.b16 %v379
    %v597 = vunpack.c.l.b16 %v380
    %v598 = vunpack.c.l.b16 %v381
    %v599 = vunpack.c.h.b16 %v381
    %v600 = vunpack.c.l.b16 %v382
    %v601 = vunpack.c.l.b16 %v383
    %v602 = vunpack.c.h.b16 %v383
    %v603 = vunpack.c.l.b16 %v384
    %v604 = vunpack.c.l.b16 %v385
    %v605 = vunpack.c.h.b16 %v385
    %v606 = vunpack.c.l.b16 %v386
    %v607 = vunpack.c.l.b16 %v387
    %v608 = vunpack.c.h.b16 %v387
    %v609 = vunpack.c.l.b16 %v388
    %v610 = vunpack.c.l.b16 %v389
    %v611 = vunpack.c.h.b16 %v389
    %v612 = vunpack.c.l.b16 %v390
    %v613 = vunpack.c.l.b16 %v391
    %v614 = vunpack.c.h.b16 %v391
    %v615 = vunpack.c.l.b16 %v392
    %v616 = vunpack.c.l.b16 %v393
    %v617 = vunpack.c.h.b16 %v393
    %v618 = vunpack.c.l.b16 %v394
    %v619 = vunpack.c.l.b16 %v395
    %v620 = vunpack.c.h.b16 %v395
    %v621 = vunpack.c.l.b16 %v396
    %v622 = vunpack.c.l.b16 %v397
    %v623 = vunpack.c.h.b16 %v397
    %v624 = vunpack.c.l.b16 %v398
    %v625 = vunpack.c.l.b16 %v399
    %v626 = vunpack.c.h.b16 %v399
    %v627 = vunpack.c.l.b16 %v400
    %v628 = vunpack.c.l.b16 %v401
    %v629 = vunpack.c.h.b16 %v401
    %v630 = vunpack.c.l.b16 %v402
    %v631 = vunpack.c.l.b16 %v403
    %v632 = vunpack.c.h.b16 %v403
    %v633 = vunpack.c.l.b16 %v404
    %v634 = vunpack.c.l.b16 %v405
    %v635 = vunpack.c.h.b16 %v405
    %v636 = vunpack.c.l.b16 %v406
    %v637 = vunpack.c.l.b16 %v407
    %v638 = vunpack.c.h.b16 %v407
    %v639 = vunpack.c.l.b16 %v408
    %v640 = vunpack.c.l.b16 %v409
    %v641 = vunpack.c.h.b16 %v409
    %v642 = vunpack.c.l.b16 %v410
    %v643 = vunpack.c.l.b16 %v411
    %v644 = vunpack.c.h.b16 %v411
    %v645 = vunpack.c.l.b16 %v412
    %v646 = vunpack.c.l.b16 %v413
    %v647 = vunpack.c.h.b16 %v413
    %v648 = vunpack.c.l.b16 %v414
    %v649 = vunpack.c.l.b16 %v415
    %v650 = vunpack.c.h.b16 %v415
    %v651 = vunpack.c.l.b16 %v416
    %v652 = vunpack.c.l.b16 %v417
    %v653 = vunpack.c.h.b16 %v417
    %v654 = vunpack.c.l.b16 %v418
    %v655 = vunpack.c.l.b16 %v419
    %v656 = vunpack.c.h.b16 %v419
    %v657 = vunpack.c.l.b16 %v420
    %v658 = vunpack.c.l.b16 %v421
    %v659 = vunpack.c.h.b16 %v421
    %v660 = vunpack.c.l.b16 %v422
    %v661 = vunpack.c.l.b16 %v423
    %v662 = vunpack.c.h.b16 %v423
    %v663 = vunpack.c.l.b16 %v424
    %v664 = vunpack.c.l.b16 %v425
    %v665 = vunpack.c.h.b16 %v425
    %v666 = vunpack.c.l.b16 %v426
    %v667 = vunpack.c.l.b16 %v427
    %v668 = vunpack.c.h.b16 %v427
    %v669 = vunpack.c.l.b16 %v428
    %v670 = vunpack.c.l.b16 %v429
    %v671 = vunpack.c.h.b16 %v429
    %v672 = vunpack.c.l.b16 %v430
    %v673 = vunpack.c.l.b16 %v431
    %v674 = vunpack.c.h.b16 %v431
    %v675 = vunpack.c.l.b16 %v432
    %v676 = vunpack.c.l.b16 %v433
    %v677 = vunpack.c.h.b16 %v433
    %v678 = vunpack.c.l.b16 %v434
    %v679 = vunpack.c.l.b16 %v435
    %v680 = vunpack.c.h.b16 %v435
    %v681 = vunpack.c.l.b16 %v436
    %v682 = vunpack.c.l.b16 %v437
    %v683 = vunpack.c.h.b16 %v437
    %v684 = vunpack.c.l.b16 %v438
    %v685 = vunpack.c.l.b16 %v439
    %v686 = vunpack.c.h.b16 %v439
    %v687 = vunpack.c.l.b16 %v440
    %v688 = vunpack.c.l.b16 %v441
    %v689 = vunpack.c.h.b16 %v441
    %v690 = vunpack.c.l.b16 %v442
    %v691 = vunpack.c.l.b16 %v443
    %v692 = vunpack.c.h.b16 %v443
    %v693 = vunpack.c.l.b16 %v444
    %v694 = vunpack.c.l.b16 %v445
    %v695 = vunpack.c.h.b16 %v445
    %v696 = vunpack.c.l.b16 %v446
    %v697 = vunpack.c.l.b16 %v447
    %v698 = vunpack.c.h.b16 %v447
    %v699 = vunpack.c.l.b16 %v448
    %v700 = vunpack.c.l.b16 %v449
    %v701 = vunpack.c.h.b16 %v449
    %v702 = vunpack.c.l.b16 %v450
    %v703 = vpack.c.b16 %v562, %v559
    %v704 = vpack.c.b16 %v563, %v560
    %v705 = vpack.c.b16 %v564, %v561
    %v706 = vpack.c.b16 %v568, %v565
    %v707 = vpack.c.b16 %v569, %v566
    %v708 = vpack.c.b16 %v570, %v567
    %v709 = vpack.c.b16 %v574, %v571
    %v710 = vpack.c.b16 %v575, %v572
    %v711 = vpack.c.b16 %v576, %v573
    %v712 = vpack.c.b16 %v580, %v577
    %v713 = vpack.c.b16 %v581, %v578
    %v714 = vpack.c.b16 %v582, %v579
    %v715 = vpack.c.b16 %v586, %v583
    %v716 = vpack.c.b16 %v587, %v584
    %v717 = vpack.c.b16 %v588, %v585
    %v718 = vpack.c.b16 %v592, %v589
    %v719 = vpack.c.b16 %v593, %v590
    %v720 = vpack.c.b16 %v594, %v591
    %v721 = vpack.c.b16 %v598, %v595
    %v722 = vpack.c.b16 %v599, %v596
    %v723 = vpack.c.b16 %v600, %v597
    %v724 = vpack.c.b16 %v604, %v601
    %v725 = vpack.c.b16 %v605, %v602
    %v726 = vpack.c.b16 %v606, %v603
    %v727 = vpack.c.b16 %v610, %v607
    %v728 = vpack.c.b16 %v611, %v608
    %v729 = vpack.c.b16 %v612, %v609
    %v730 = vpack.c.b16 %v616, %v613
    %v731 = vpack.c.b16 %v617, %v614
    %v732 = vpack.c.b16 %v618, %v615
    %v733 = vpack.c.b16 %v622, %v619
    %v734 = vpack.c.b16 %v623, %v620
    %v735 = vpack.c.b16 %v624, %v621
    %v736 = vpack.c.b16 %v628, %v625
    %v737 = vpack.c.b16 %v629, %v626
    %v738 = vpack.c.b16 %v630, %v627
    %v739 = vpack.c.b16 %v634, %v631
    %v740 = vpack.c.b16 %v635, %v632
    %v741 = vpack.c.b16 %v636, %v633
    %v742 = vpack.c.b16 %v640, %v637
    %v743 = vpack.c.b16 %v641, %v638
    %v744 = vpack.c.b16 %v642, %v639
    %v745 = vpack.c.b16 %v646, %v643
    %v746 = vpack.c.b16 %v647, %v644
    %v747 = vpack.c.b16 %v648, %v645
    %v748 = vpack.c.b16 %v652, %v649
    %v749 = vpack.c.b16 %v653, %v650
    %v750 = vpack.c.b16 %v654, %v651
    %v751 = vpack.c.b16 %v658, %v655
    %v752 = vpack.c.b16 %v659, %v656
    %v753 = vpack.c.b16 %v660, %v657
    %v754 = vpack.c.b16 %v664, %v661
    %v755 = vpack.c.b16 %v665, %v662
    %v756 = vpack.c.b16 %v666, %v663
    %v757 = vpack.c.b16 %v670, %v667
    %v758 = vpack.c.b16 %v671, %v668
    %v759 = vpack.c.b16 %v672, %v669
    %v760 = vpack.c.b16 %v676, %v673
    %v761 = vpack.c.b16 %v677, %v674
    %v762 = vpack.c.b16 %v678, %v675
    %v763 = vpack.c.b16 %v682, %v679
    %v764 = vpack.c.b16 %v683, %v680
    %v765 = vpack.c.b16 %v684, %v681
    %v766 = vpack.c.b16 %v688, %v685
    %v767 = vpack.c.b16 %v689, %v686
    %v768 = vpack.c.b16 %v690, %v687
    %v769 = vpack.c.b16 %v694, %v691
    %v770 = vpack.c.b16 %v695, %v692
    %v771 = vpack.c.b16 %v696, %v693
    %v772 = vpack.c.b16 %v700, %v697
    %v773 = vpack.c.b16 %v701, %v698
    %v774 = vpack.c.b16 %v702, %v699
    %847 = vmatprep.subr.bf16.mxu0 %v704
    %848 = vmatpush1.bf16.msra.mxu0 %v703
    %849 = vmatprep.subr.bf16.mxu0 %v707
    %850 = vmatpush1.bf16.msra.mxu0 %v706
    %851 = vmatprep.subr.bf16.mxu0 %v710
    %852 = vmatpush1.bf16.msra.mxu0 %v709
    %853 = vmatprep.subr.bf16.mxu0 %v713
    %854 = vmatpush1.bf16.msra.mxu0 %v712
    %855 = vmatprep.subr.bf16.mxu0 %v716
    %856 = vmatpush1.bf16.msra.mxu0 %v715
    %857 = vmatprep.subr.bf16.mxu0 %v719
    %858 = vmatpush1.bf16.msra.mxu0 %v718
    %859 = vmatprep.subr.bf16.mxu0 %v722
    %860 = vmatpush1.bf16.msra.mxu0 %v721
    %861 = vmatprep.subr.bf16.mxu0 %v725
    %862 = vmatpush1.bf16.msra.mxu0 %v724
    %863 = vmatprep.subr.bf16.mxu0 %v728
    %864 = vmatpush1.bf16.msra.mxu0 %v727
    %865 = vmatprep.subr.bf16.mxu0 %v731
    %866 = vmatpush1.bf16.msra.mxu0 %v730
    %867 = vmatprep.subr.bf16.mxu0 %v734
    %868 = vmatpush1.bf16.msra.mxu0 %v733
    %869 = vmatprep.subr.bf16.mxu0 %v737
    %870 = vmatpush1.bf16.msra.mxu0 %v736
    %871 = vmatprep.subr.bf16.mxu0 %v740
    %872 = vmatpush1.bf16.msra.mxu0 %v739
    %873 = vmatprep.subr.bf16.mxu0 %v743
    %874 = vmatpush1.bf16.msra.mxu0 %v742
    %875 = vmatprep.subr.bf16.mxu0 %v746
    %876 = vmatpush1.bf16.msra.mxu0 %v745
    %877 = vmatprep.subr.bf16.mxu0 %v749
    %878 = vmatpush1.bf16.msra.mxu0 %v748
    %879 = vmatprep.mubr.bf16.mxu0 %v353
    %880 = vmatmul.mubr.bf16.gmra.mrb[0].mxu0 %v352
    %v881 = vpop.f32.mrb[0].mxu0
    %v882 = vadd.f32 %v454, %v881
    %v883 = vpop.f32.mrb[0].mxu0
    %v884 = vadd.f32 %v458, %v883
    %v885 = vpop.f32.mrb[0].mxu0
    %v886 = vpop.f32.mrb[0].mxu0
    %887 = vdwg.mxu0
    %888 = vmatprep.subr.bf16.mxu0 %v752
    %889 = vmatpush1.bf16.msra.mxu0 %v751
    %890 = vmatprep.subr.bf16.mxu0 %v755
    %891 = vmatpush1.bf16.msra.mxu0 %v754
    %892 = vmatprep.subr.bf16.mxu0 %v758
    %893 = vmatpush1.bf16.msra.mxu0 %v757
    %894 = vmatprep.subr.bf16.mxu0 %v761
    %895 = vmatpush1.bf16.msra.mxu0 %v760
    %896 = vmatprep.subr.bf16.mxu0 %v764
    %897 = vmatpush1.bf16.msra.mxu0 %v763
    %898 = vmatprep.subr.bf16.mxu0 %v767
    %899 = vmatpush1.bf16.msra.mxu0 %v766
    %900 = vmatprep.subr.bf16.mxu0 %v770
    %901 = vmatpush1.bf16.msra.mxu0 %v769
    %902 = vmatprep.subr.bf16.mxu0 %v773
    %903 = vmatpush1.bf16.msra.mxu0 %v772
    %904 = vmatprep.subr.bf16.mxu0 0
    %905 = vmatpush1.bf16.msra.mxu0 0
    %906 = vmatprep.subr.bf16.mxu0 0
    %907 = vmatpush1.bf16.msra.mxu0 0
    %908 = vmatprep.subr.bf16.mxu0 0
    %909 = vmatpush1.bf16.msra.mxu0 0
    %910 = vmatprep.subr.bf16.mxu0 0
    %911 = vmatpush1.bf16.msra.mxu0 0
    %912 = vmatprep.subr.bf16.mxu0 0
    %913 = vmatpush1.bf16.msra.mxu0 0
    %914 = vmatprep.subr.bf16.mxu0 0
    %915 = vmatpush1.bf16.msra.mxu0 0
    %916 = vmatprep.subr.bf16.mxu0 0
    %917 = vmatpush1.bf16.msra.mxu0 0
    %918 = vmatprep.subr.bf16.mxu0 0
    %919 = vmatpush1.bf16.msra.mxu0 0
    %920 = vmatprep.mubr.bf16.mxu0 0
    %921 = vmatmul.mubr.bf16.gmra.mrb[0].mxu0 %v354
    %v922 = vpop.f32.mrb[0].mxu0
    %v923 = vadd.f32 %v882, %v922
    %v924 = vpop.f32.mrb[0].mxu0
    %v925 = vadd.f32 %v884, %v924
    %v926 = vpop.f32.mrb[0].mxu0
    %v927 = vpop.f32.mrb[0].mxu0
    %928 = vdwg.mxu0
    %929 = vmatprep.subr.bf16.mxu0 0
    %930 = vmatpush1.bf16.msra.mxu0 %v705
    %931 = vmatprep.subr.bf16.mxu0 0
    %932 = vmatpush1.bf16.msra.mxu0 %v708
    %933 = vmatprep.subr.bf16.mxu0 0
    %934 = vmatpush1.bf16.msra.mxu0 %v711
    %935 = vmatprep.subr.bf16.mxu0 0
    %936 = vmatpush1.bf16.msra.mxu0 %v714
    %937 = vmatprep.subr.bf16.mxu0 0
    %938 = vmatpush1.bf16.msra.mxu0 %v717
    %939 = vmatprep.subr.bf16.mxu0 0
    %940 = vmatpush1.bf16.msra.mxu0 %v720
    %941 = vmatprep.subr.bf16.mxu0 0
    %942 = vmatpush1.bf16.msra.mxu0 %v723
    %943 = vmatprep.subr.bf16.mxu0 0
    %944 = vmatpush1.bf16.msra.mxu0 %v726
    %945 = vmatprep.subr.bf16.mxu0 0
    %946 = vmatpush1.bf16.msra.mxu0 %v729
    %947 = vmatprep.subr.bf16.mxu0 0
    %948 = vmatpush1.bf16.msra.mxu0 %v732
    %949 = vmatprep.subr.bf16.mxu0 0
    %950 = vmatpush1.bf16.msra.mxu0 %v735
    %951 = vmatprep.subr.bf16.mxu0 0
    %952 = vmatpush1.bf16.msra.mxu0 %v738
    %953 = vmatprep.subr.bf16.mxu0 0
    %954 = vmatpush1.bf16.msra.mxu0 %v741
    %955 = vmatprep.subr.bf16.mxu0 0
    %956 = vmatpush1.bf16.msra.mxu0 %v744
    %957 = vmatprep.subr.bf16.mxu0 0
    %958 = vmatpush1.bf16.msra.mxu0 %v747
    %959 = vmatprep.subr.bf16.mxu0 0
    %960 = vmatpush1.bf16.msra.mxu0 %v750
    %961 = vmatprep.mubr.bf16.mxu0 %v353
    %962 = vmatmul.mubr.bf16.gmra.mrb[0].mxu0 %v352
    %v963 = vpop.f32.mrb[0].mxu0
    %v964 = vadd.f32 %v462, %v963
    %v965 = vpop.f32.mrb[0].mxu0
    %v966 = vpop.f32.mrb[0].mxu0
    %v967 = vpop.f32.mrb[0].mxu0
    %968 = vdwg.mxu0
    %969 = vmatprep.subr.bf16.mxu0 0
    %970 = vmatpush1.bf16.msra.mxu0 %v753
    %971 = vmatprep.subr.bf16.mxu0 0
    %972 = vmatpush1.bf16.msra.mxu0 %v756
    %973 = vmatprep.subr.bf16.mxu0 0
    %974 = vmatpush1.bf16.msra.mxu0 %v759
    %975 = vmatprep.subr.bf16.mxu0 0
    %976 = vmatpush1.bf16.msra.mxu0 %v762
    %977 = vmatprep.subr.bf16.mxu0 0
    %978 = vmatpush1.bf16.msra.mxu0 %v765
    %979 = vmatprep.subr.bf16.mxu0 0
    %980 = vmatpush1.bf16.msra.mxu0 %v768
    %981 = vmatprep.subr.bf16.mxu0 0
    %982 = vmatpush1.bf16.msra.mxu0 %v771
    %983 = vmatprep.subr.bf16.mxu0 0
    %984 = vmatpush1.bf16.msra.mxu0 %v774
    %985 = vmatprep.subr.bf16.mxu0 0
    %986 = vmatpush1.bf16.msra.mxu0 0
    %987 = vmatprep.subr.bf16.mxu0 0
    %988 = vmatpush1.bf16.msra.mxu0 0
    %989 = vmatprep.subr.bf16.mxu0 0
    %990 = vmatpush1.bf16.msra.mxu0 0
    %991 = vmatprep.subr.bf16.mxu0 0
    %992 = vmatpush1.bf16.msra.mxu0 0
    %993 = vmatprep.subr.bf16.mxu0 0
    %994 = vmatpush1.bf16.msra.mxu0 0
    %995 = vmatprep.subr.bf16.mxu0 0
    %996 = vmatpush1.bf16.msra.mxu0 0
    %997 = vmatprep.subr.bf16.mxu0 0
    %998 = vmatpush1.bf16.msra.mxu0 0
    %999 = vmatprep.subr.bf16.mxu0 0
    %1000 = vmatpush1.bf16.msra.mxu0 0
    %1001 = vmatprep.mubr.bf16.mxu0 0
    %1002 = vmatmul.mubr.bf16.gmra.mrb[0].mxu0 %v354
    %v1003 = vpop.f32.mrb[0].mxu0
    %v1004 = vadd.f32 %v964, %v1003
    %v1005 = vpop.f32.mrb[0].mxu0
    %v1006 = vpop.f32.mrb[0].mxu0
    %v1007 = vpop.f32.mrb[0].mxu0
    %1008 = vdwg.mxu0
    %v1009 = vmax.f32 %v923, 0.0
    %v1010 = vmax.f32 %v925, 0.0
    %v1011 = vmax.f32 %v1004, 0.0
    %v1012 = vadd.f32 %v1009, %v1010
    %v1013 = vadd.f32 %v1012, %v1011
    %1014 = vadd.xlane.f32.xlu0 %v1013
    %v1015 = vpop.xlane.xlu0 %1014
    %v1016 = vmul.f32 %v1015, 0.0033333334
    %v1017 = vsub.f32 %v1009, %v1016
    %v1018 = vsub.f32 %v1010, %v1016
    %v1019 = vsub.f32 %v1011, %v1016
    %v1020 = vmul.f32 %v1017, %v36
    %v1021 = vmul.f32 %v1018, %v37
    %v1022 = vmul.f32 %v1019, %v38
    %v1023 = vmul.f32 %v1020, %v1020
    %v1024 = vmul.f32 %v1021, %v1021
    %v1025 = vmul.f32 %v1022, %v1022
    %v1026 = vadd.f32 %v1023, %v1024
    %v1027 = vadd.f32 %v1026, %v1025
    %1028 = vadd.xlane.f32.xlu0 %v1027
    %v1029 = vpop.xlane.xlu0 %1028
    %v1030 = vmul.f32 %v1029, 0.0033333334
    %v1031 = vadd.f32 %v1030, 1e-05
    %v1032 = vrsqrt.pop %v1031
    %v1033 = vmul.f32 %v1020, %v1032
    %v1034 = vmul.f32 %v1021, %v1032
    %v1035 = vmul.f32 %v1022, %v1032
    %v1036 = vmul.f32 %v1033, %v325
    %v1037 = vmul.f32 %v1034, %v329
    %v1038 = vmul.f32 %v1035, %v333
    %v1039 = vadd.f32 %v1036, %v340
    %v1040 = vadd.f32 %v1037, %v344
    %v1041 = vadd.f32 %v1038, %v348
    %v1042 = vpack.c.bf16 %v1039, %v1039
    %v1043 = vpack.c.bf16 %v1040, %v1040
    %v1044 = vpack.c.bf16 %v1041, %v1041
    %v1045 = vld [vmem:[%s3] sm:$0xf]
    %v1046 = vld [vmem:[%s3 + $0x4] sm:$0xf]
    %v1047 = vld [vmem:[%s3 + $0x8] sm:$0xf]
    %v1048 = vld [vmem:[%s3 + $0xc] sm:$0xf]
    %v1049 = vld [vmem:[%s3 + $0x10] sm:$0xf]
    %v1050 = vld [vmem:[%s3 + $0x14] sm:$0xf]
    %v1051 = vld [vmem:[%s3 + $0x18] sm:$0xf]
    %v1052 = vld [vmem:[%s3 + $0x1c] sm:$0xf]
    %v1053 = vld [vmem:[%s3 + $0x20] sm:$0xf]
    %v1054 = vld [vmem:[%s3 + $0x24] sm:$0xf]
    %v1055 = vld [vmem:[%s3 + $0x28] sm:$0xf]
    %v1056 = vld [vmem:[%s3 + $0x2c] sm:$0xf]
    %v1057 = vld [vmem:[%s3 + $0x30] sm:$0xf]
    %v1058 = vld [vmem:[%s3 + $0x34] sm:$0xf]
    %v1059 = vld [vmem:[%s3 + $0x38] sm:$0xf]
    %v1060 = vld [vmem:[%s3 + $0x3c] sm:$0xf]
    %v1061 = vld [vmem:[%s3 + $0x40] sm:$0xf]
    %v1062 = vld [vmem:[%s3 + $0x44] sm:$0xf]
    %v1063 = vld [vmem:[%s3 + $0x48] sm:$0xf]
    %v1064 = vld [vmem:[%s3 + $0x4c] sm:$0xf]
    %v1065 = vld [vmem:[%s3 + $0x50] sm:$0xf]
    %v1066 = vld [vmem:[%s3 + $0x54] sm:$0xf]
    %v1067 = vld [vmem:[%s3 + $0x58] sm:$0xf]
    %v1068 = vld [vmem:[%s3 + $0x5c] sm:$0xf]
    %v1069 = vld [vmem:[%s3 + $0x60] sm:$0xf]
    %v1070 = vld [vmem:[%s3 + $0x64] sm:$0xf]
    %v1071 = vld [vmem:[%s3 + $0x68] sm:$0xf]
    %v1072 = vld [vmem:[%s3 + $0x6c] sm:$0xf]
    %v1073 = vld [vmem:[%s3 + $0x70] sm:$0xf]
    %v1074 = vld [vmem:[%s3 + $0x74] sm:$0xf]
    %v1075 = vld [vmem:[%s3 + $0x78] sm:$0xf]
    %v1076 = vld [vmem:[%s3 + $0x7c] sm:$0xf]
    %v1077 = vld [vmem:[%s3 + $0x80] sm:$0xf]
    %v1078 = vld [vmem:[%s3 + $0x84] sm:$0xf]
    %v1079 = vld [vmem:[%s3 + $0x88] sm:$0xf]
    %v1080 = vld [vmem:[%s3 + $0x8c] sm:$0xf]
    %v1081 = vld [vmem:[%s3 + $0x90] sm:$0xf]
    %v1082 = vld [vmem:[%s3 + $0x94] sm:$0xf]
    %v1083 = vld [vmem:[%s3 + $0x98] sm:$0xf]
    %v1084 = vld [vmem:[%s3 + $0x9c] sm:$0xf]
    %v1085 = vld [vmem:[%s3 + $0xa0] sm:$0xf]
    %v1086 = vld [vmem:[%s3 + $0xa4] sm:$0xf]
    %v1087 = vld [vmem:[%s3 + $0xa8] sm:$0xf]
    %v1088 = vld [vmem:[%s3 + $0xac] sm:$0xf]
    %v1089 = vld [vmem:[%s3 + $0xb0] sm:$0xf]
    %v1090 = vld [vmem:[%s3 + $0xb4] sm:$0xf]
    %v1091 = vld [vmem:[%s3 + $0xb8] sm:$0xf]
    %v1092 = vld [vmem:[%s3 + $0xbc] sm:$0xf]
    %v1093 = vlaneseq
    %v1094 = vshrl.u32 %v1093, 7
    %v1095 = vsub.s32 4, %v1094
    %v1096 = vrot.slane %v23, %v1095
    %v1145 = vunpack.c.l.b16 %v1045
    %v1146 = vunpack.c.l.b16 %v1046
    %v1147 = vunpack.c.l.b16 %v1047
    %v1148 = vunpack.c.l.b16 %v1048
    %v1149 = vunpack.c.l.b16 %v1049
    %v1150 = vunpack.c.l.b16 %v1050
    %v1151 = vunpack.c.l.b16 %v1051
    %v1152 = vunpack.c.l.b16 %v1052
    %v1153 = vunpack.c.l.b16 %v1053
    %v1154 = vunpack.c.l.b16 %v1054
    %v1155 = vunpack.c.l.b16 %v1055
    %v1156 = vunpack.c.l.b16 %v1056
    %v1157 = vunpack.c.l.b16 %v1057
    %v1158 = vunpack.c.l.b16 %v1058
    %v1159 = vunpack.c.l.b16 %v1059
    %v1160 = vunpack.c.l.b16 %v1060
    %v1161 = vunpack.c.l.b16 %v1061
    %v1162 = vunpack.c.l.b16 %v1062
    %v1163 = vunpack.c.l.b16 %v1063
    %v1164 = vunpack.c.l.b16 %v1064
    %v1165 = vunpack.c.l.b16 %v1065
    %v1166 = vunpack.c.l.b16 %v1066
    %v1167 = vunpack.c.l.b16 %v1067
    %v1168 = vunpack.c.l.b16 %v1068
    %v1169 = vunpack.c.l.b16 %v1069
    %v1170 = vunpack.c.l.b16 %v1070
    %v1171 = vunpack.c.l.b16 %v1071
    %v1172 = vunpack.c.l.b16 %v1072
    %v1173 = vunpack.c.l.b16 %v1073
    %v1174 = vunpack.c.l.b16 %v1074
    %v1175 = vunpack.c.l.b16 %v1075
    %v1176 = vunpack.c.l.b16 %v1076
    %v1177 = vunpack.c.l.b16 %v1077
    %v1178 = vunpack.c.l.b16 %v1078
    %v1179 = vunpack.c.l.b16 %v1079
    %v1180 = vunpack.c.l.b16 %v1080
    %v1181 = vunpack.c.l.b16 %v1081
    %v1182 = vunpack.c.l.b16 %v1082
    %v1183 = vunpack.c.l.b16 %v1083
    %v1184 = vunpack.c.l.b16 %v1084
    %v1185 = vunpack.c.l.b16 %v1085
    %v1186 = vunpack.c.l.b16 %v1086
    %v1187 = vunpack.c.l.b16 %v1087
    %v1188 = vunpack.c.l.b16 %v1088
    %v1189 = vunpack.c.l.b16 %v1089
    %v1190 = vunpack.c.l.b16 %v1090
    %v1191 = vunpack.c.l.b16 %v1091
    %v1192 = vunpack.c.l.b16 %v1092
    %v1193 = vpack.c.b16 %v1146, %v1145
    %v1194 = vpack.c.b16 %v1148, %v1147
    %v1195 = vpack.c.b16 %v1150, %v1149
    %v1196 = vpack.c.b16 %v1152, %v1151
    %v1197 = vpack.c.b16 %v1154, %v1153
    %v1198 = vpack.c.b16 %v1156, %v1155
    %v1199 = vpack.c.b16 %v1158, %v1157
    %v1200 = vpack.c.b16 %v1160, %v1159
    %v1201 = vpack.c.b16 %v1162, %v1161
    %v1202 = vpack.c.b16 %v1164, %v1163
    %v1203 = vpack.c.b16 %v1166, %v1165
    %v1204 = vpack.c.b16 %v1168, %v1167
    %v1205 = vpack.c.b16 %v1170, %v1169
    %v1206 = vpack.c.b16 %v1172, %v1171
    %v1207 = vpack.c.b16 %v1174, %v1173
    %v1208 = vpack.c.b16 %v1176, %v1175
    %v1209 = vpack.c.b16 %v1178, %v1177
    %v1210 = vpack.c.b16 %v1180, %v1179
    %v1211 = vpack.c.b16 %v1182, %v1181
    %v1212 = vpack.c.b16 %v1184, %v1183
    %v1213 = vpack.c.b16 %v1186, %v1185
    %v1214 = vpack.c.b16 %v1188, %v1187
    %v1215 = vpack.c.b16 %v1190, %v1189
    %v1216 = vpack.c.b16 %v1192, %v1191
    %1241 = vmatprep.subr.bf16.mxu0 0
    %1242 = vmatpush1.bf16.msra.mxu0 %v1193
    %1243 = vmatprep.subr.bf16.mxu0 0
    %1244 = vmatpush1.bf16.msra.mxu0 %v1194
    %1245 = vmatprep.subr.bf16.mxu0 0
    %1246 = vmatpush1.bf16.msra.mxu0 %v1195
    %1247 = vmatprep.subr.bf16.mxu0 0
    %1248 = vmatpush1.bf16.msra.mxu0 %v1196
    %1249 = vmatprep.subr.bf16.mxu0 0
    %1250 = vmatpush1.bf16.msra.mxu0 %v1197
    %1251 = vmatprep.subr.bf16.mxu0 0
    %1252 = vmatpush1.bf16.msra.mxu0 %v1198
    %1253 = vmatprep.subr.bf16.mxu0 0
    %1254 = vmatpush1.bf16.msra.mxu0 %v1199
    %1255 = vmatprep.subr.bf16.mxu0 0
    %1256 = vmatpush1.bf16.msra.mxu0 %v1200
    %1257 = vmatprep.subr.bf16.mxu0 0
    %1258 = vmatpush1.bf16.msra.mxu0 %v1201
    %1259 = vmatprep.subr.bf16.mxu0 0
    %1260 = vmatpush1.bf16.msra.mxu0 %v1202
    %1261 = vmatprep.subr.bf16.mxu0 0
    %1262 = vmatpush1.bf16.msra.mxu0 %v1203
    %1263 = vmatprep.subr.bf16.mxu0 0
    %1264 = vmatpush1.bf16.msra.mxu0 %v1204
    %1265 = vmatprep.subr.bf16.mxu0 0
    %1266 = vmatpush1.bf16.msra.mxu0 %v1205
    %1267 = vmatprep.subr.bf16.mxu0 0
    %1268 = vmatpush1.bf16.msra.mxu0 %v1206
    %1269 = vmatprep.subr.bf16.mxu0 0
    %1270 = vmatpush1.bf16.msra.mxu0 %v1207
    %1271 = vmatprep.subr.bf16.mxu0 0
    %1272 = vmatpush1.bf16.msra.mxu0 %v1208
    %1273 = vmatprep.mubr.bf16.mxu0 %v1043
    %1274 = vmatmul.mubr.bf16.gmra.mrb[0].mxu0 %v1042
    %v1275 = vpop.f32.mrb[0].mxu0
    %v1276 = vadd.f32 %v1096, %v1275
    %v1277 = vpop.f32.mrb[0].mxu0
    %v1278 = vpop.f32.mrb[0].mxu0
    %v1279 = vpop.f32.mrb[0].mxu0
    %1280 = vdwg.mxu0
    %1281 = vmatprep.subr.bf16.mxu0 0
    %1282 = vmatpush1.bf16.msra.mxu0 %v1209
    %1283 = vmatprep.subr.bf16.mxu0 0
    %1284 = vmatpush1.bf16.msra.mxu0 %v1210
    %1285 = vmatprep.subr.bf16.mxu0 0
    %1286 = vmatpush1.bf16.msra.mxu0 %v1211
    %1287 = vmatprep.subr.bf16.mxu0 0
    %1288 = vmatpush1.bf16.msra.mxu0 %v1212
    %1289 = vmatprep.subr.bf16.mxu0 0
    %1290 = vmatpush1.bf16.msra.mxu0 %v1213
    %1291 = vmatprep.subr.bf16.mxu0 0
    %1292 = vmatpush1.bf16.msra.mxu0 %v1214
    %1293 = vmatprep.subr.bf16.mxu0 0
    %1294 = vmatpush1.bf16.msra.mxu0 %v1215
    %1295 = vmatprep.subr.bf16.mxu0 0
    %1296 = vmatpush1.bf16.msra.mxu0 %v1216
    %1297 = vmatprep.subr.bf16.mxu0 0
    %1298 = vmatpush1.bf16.msra.mxu0 0
    %1299 = vmatprep.subr.bf16.mxu0 0
    %1300 = vmatpush1.bf16.msra.mxu0 0
    %1301 = vmatprep.subr.bf16.mxu0 0
    %1302 = vmatpush1.bf16.msra.mxu0 0
    %1303 = vmatprep.subr.bf16.mxu0 0
    %1304 = vmatpush1.bf16.msra.mxu0 0
    %1305 = vmatprep.subr.bf16.mxu0 0
    %1306 = vmatpush1.bf16.msra.mxu0 0
    %1307 = vmatprep.subr.bf16.mxu0 0
    %1308 = vmatpush1.bf16.msra.mxu0 0
    %1309 = vmatprep.subr.bf16.mxu0 0
    %1310 = vmatpush1.bf16.msra.mxu0 0
    %1311 = vmatprep.subr.bf16.mxu0 0
    %1312 = vmatpush1.bf16.msra.mxu0 0
    %1313 = vmatprep.mubr.bf16.mxu0 0
    %1314 = vmatmul.mubr.bf16.gmra.mrb[0].mxu0 %v1044
    %v1315 = vpop.f32.mrb[0].mxu0
    %v1316 = vadd.f32 %v1276, %v1315
    %v1317 = vpop.f32.mrb[0].mxu0
    %v1318 = vpop.f32.mrb[0].mxu0
    %v1319 = vpop.f32.mrb[0].mxu0
    %1320 = vdwg.mxu0
    %1321 = vadd.xlane.f32.xlu0 %v1316
    %v1322 = vpop.xlane.xlu0 %1321
    %v1323 = vmul.f32 %v1322, 0.01
    %v1324 = vsub.f32 %v1316, %v1323
    %v1325 = vmul.f32 %v1324, %v41
    %v1326 = vmul.f32 %v1325, %v1325
    %1327 = vadd.xlane.f32.xlu0 %v1326
    %v1328 = vpop.xlane.xlu0 %1327
    %v1329 = vmul.f32 %v1328, 0.01
    %v1330 = vadd.f32 %v1329, 1e-05
    %v1331 = vrsqrt.pop %v1330
    %v1332 = vmul.f32 %v1325, %v1331
    %v1333 = vlaneseq
    %v1334 = vshrl.u32 %v1333, 7
    %v1335 = vsub.s32 5, %v1334
    %v1336 = vrot.slane %v23, %v1335
    %v1337 = vmul.f32 %v1332, %v1336
    %v1338 = vlaneseq
    %v1339 = vshrl.u32 %v1338, 7
    %v1340 = vsub.s32 6, %v1339
    %v1341 = vrot.slane %v23, %v1340
    %v1342 = vadd.f32 %v1337, %v1341
    %1343 = vst [vmem:[#allocation2] sm:$0xff] %v1342
    // Predicated region
    $region22: #{multilayer_forward.1} parent=1 // pred_check
      _
    $region23: #{multilayer_forward.1} parent=1 // pred_check_branch
      %1345 = sbr.rel (0) target = $region25
    $region24: #{multilayer_forward.1} parent=1 // pred_region
      %s1347 = ssub.s32 128, 128
      %1348 = vsyncadd [#allocation3], %s1347
      %s1350 = sshll.u32 [#allocation2], 4
      %s1351 = int_to_ptr.vmem [resolvable:$true] %s1350
      %1353 = dma.vmem_to_hbm [thread:$0]  %s1351, 128, %s5, [#allocation3]
    $region25: #{multilayer_forward.1} parent=1 // pred_fallthru
      _
    // Predicated region
    $region26: #{multilayer_forward.1} parent=1 // pred_check
      _
    $region27: #{multilayer_forward.1} parent=1 // pred_check_branch
      %1355 = sbr.rel (0) target = $region29
    $region28: #{multilayer_forward.1} parent=1 // pred_region
      %1356 = dma.done [#allocation3], 128
    $region29: #{multilayer_forward.1} parent=1 // pred_fallthru
      _
    %1357 = vsyncpa [#allocation3], 1

</llo_original>
